<compile_context>
chip_gen: v7x
topology: tpu7x:2x2x1
jax: 0.10.0
libtpu: 0.0.40
codegen_flags: <defaults>
</compile_context>

<pallas_src>
import math
from functools import partial

import jax
import jax.numpy as jnp
from jax.experimental import pallas as pl
from jax.experimental.pallas import tpu as pltpu


def _round_up(n, m):
    return ((n + m - 1) // m) * m


# ----------------------------- Pallas kernel --------------------------------
def _stacked_lstm_kernel(x_ref, h_ref, c_ref, w_ref, b_ref,
                         h_out_ref, c_out_ref, xh_scr):
    """One grid step == one LSTM layer. The [x | h] slab lives in VMEM scratch so
    activations never round-trip through HBM between layers."""
    layer = pl.program_id(0)
    Hp = h_ref.shape[-1]            # padded hidden width (multiple of 128)
    Xp = x_ref.shape[-1]            # padded input width  (multiple of 128)

    # Layer 0: load the external input into the x-slot of the fused [x | h] slab.
    @pl.when(layer == 0)
    def _():
        xh_scr[:, :Xp] = x_ref[...]

    # Current layer's recurrent state into the h-slot.
    xh_scr[:, Xp:] = h_ref[...]

    # Single fused MXU matmul: [x | h] @ [[W_ih],[W_hh]]  (bf16 in, fp32 accumulate).
    gates = jnp.dot(xh_scr[...], w_ref[...],
                    preferred_element_type=jnp.float32) + b_ref[...]   # (B, 4*Hp) fp32

    i = jax.nn.sigmoid(gates[:, 0 * Hp:1 * Hp])
    f = jax.nn.sigmoid(gates[:, 1 * Hp:2 * Hp])
    g = jnp.tanh(gates[:, 2 * Hp:3 * Hp])
    o = jax.nn.sigmoid(gates[:, 3 * Hp:4 * Hp])

    c_new = f * c_ref[...] + i * g              # fp32 cell state
    h_new = o * jnp.tanh(c_new)                 # fp32

    c_out_ref[...] = c_new
    h_out_ref[...] = h_new.astype(h_out_ref.dtype)

    # This layer's output becomes the next layer's input (x-slot). Columns beyond Hp
    # hit zero-padded weight rows, so they need not be cleared.
    xh_scr[:, :Hp] = h_new.astype(xh_scr.dtype)


@partial(jax.jit, static_argnames=("h_last",))
def _multilayer_lstm_forward(x, w_all, b_all, h_all, c_all, *, h_last):
    L, B_pad, H_pad = h_all.shape
    K_pad = w_all.shape[1]
    X_pad = K_pad - H_pad
    B, D = x.shape

    x_pad = jnp.zeros((B_pad, X_pad), jnp.bfloat16)
    x_pad = x_pad.at[:B, :D].set(x.astype(jnp.bfloat16))

    h_new, c_new = pl.pallas_call(
        _stacked_lstm_kernel,
        out_shape=(jax.ShapeDtypeStruct((L, B_pad, H_pad), jnp.bfloat16),
                   jax.ShapeDtypeStruct((L, B_pad, H_pad), jnp.float32)),
        grid=(L,),
        in_specs=[
            pl.BlockSpec((B_pad, X_pad), lambda l: (0, 0)),               # x (layer 0)
            pl.BlockSpec((None, B_pad, H_pad), lambda l: (l, 0, 0)),      # h state
            pl.BlockSpec((None, B_pad, H_pad), lambda l: (l, 0, 0)),      # c state
            pl.BlockSpec((None, K_pad, 4 * H_pad), lambda l: (l, 0, 0)),  # fused W
            pl.BlockSpec((None, 1, 4 * H_pad), lambda l: (l, 0, 0)),      # fused bias
        ],
        out_specs=(
            pl.BlockSpec((None, B_pad, H_pad), lambda l: (l, 0, 0)),      # h out
            pl.BlockSpec((None, B_pad, H_pad), lambda l: (l, 0, 0)),      # c out
        ),
        scratch_shapes=[pltpu.VMEM((B_pad, K_pad), jnp.bfloat16)],        # [x | h] slab
        input_output_aliases={1: 0, 2: 1},                                # in-place h, c
        compiler_params=pltpu.CompilerParams(
            dimension_semantics=("arbitrary",)),                          # layers are serial
    )(x_pad, h_all, c_all, w_all, b_all)

    y = h_new[L - 1, :B, :h_last].astype(x.dtype)
    return y, h_new, c_new


# ---------------------------- Container (glue) -------------------------------
class MultiLayerLSTM:
    """JAX/Pallas re-implementation of the PyTorch MultiLayerLSTM container."""

    LANE = 128      # lane width
    SUBLANE = 16    # bf16-friendly batch padding

    def __init__(self, input_size, layer_sizes, key, dtype=jnp.float32):
        assert len(layer_sizes) > 0
        self.input_size = input_size
        self.layer_sizes = list(layer_sizes)
        self.H_pad = _round_up(max(self.layer_sizes), self.LANE)
        self.X_pad = max(_round_up(input_size, self.LANE), self.H_pad)
        self.K_pad = self.X_pad + self.H_pad

        self.params = []        # unpadded fp32 (w_ih, w_hh, b) per layer (reference use)
        w_stack, b_stack = [], []
        prev = input_size
        for size in self.layer_sizes:
            key, k1, k2, k3, k4 = jax.random.split(key, 5)
            bound = 1.0 / math.sqrt(size)
            # PyTorch LSTMCell init: U(-1/sqrt(H), 1/sqrt(H)); stored transposed.
            w_ih = jax.random.uniform(k1, (prev, 4 * size), dtype, -bound, bound)
            w_hh = jax.random.uniform(k2, (size, 4 * size), dtype, -bound, bound)
            b_ih = jax.random.uniform(k3, (1, 4 * size), dtype, -bound, bound)
            b_hh = jax.random.uniform(k4, (1, 4 * size), dtype, -bound, bound)
            b = b_ih + b_hh
            self.params.append((w_ih, w_hh, b))

            # Embed [W_ih ; W_hh] into a zero-padded (K_pad, 4*H_pad) slab with each
            # gate occupying a lane-aligned 128-multiple column group.
            W = jnp.zeros((self.K_pad, 4 * self.H_pad), jnp.float32)
            bp = jnp.zeros((4 * self.H_pad,), jnp.float32)
            for g in range(4):
                W = W.at[:prev, g * self.H_pad:g * self.H_pad + size].set(
                    w_ih[:, g * size:(g + 1) * size])
                W = W.at[self.X_pad:self.X_pad + size,
                         g * self.H_pad:g * self.H_pad + size].set(
                    w_hh[:, g * size:(g + 1) * size])
                bp = bp.at[g * self.H_pad:g * self.H_pad + size].set(
                    b[0, g * size:(g + 1) * size])
            w_stack.append(W)
            b_stack.append(bp)
            prev = size

        # Stacked, padded weights: bf16 matmul operands, fp32 bias added post-matmul.
        self.w_all = jnp.stack(w_stack).astype(jnp.bfloat16)   # (L, K_pad, 4*H_pad)
        self.b_all = jnp.stack(b_stack)[:, None, :]            # (L, 1, 4*H_pad) fp32
        self.h_all = None
        self.c_all = None
        self.batch = None

    def reset_hiddens(self, batch_size=1, dtype=jnp.float32):
        L = len(self.layer_sizes)
        self.batch = batch_size
        B_pad = max(self.SUBLANE, _round_up(batch_size, self.SUBLANE))
        self.h_all = jnp.zeros((L, B_pad, self.H_pad), jnp.bfloat16)   # h carried bf16
        self.c_all = jnp.zeros((L, B_pad, self.H_pad), jnp.float32)    # c carried fp32

    def __call__(self, x):
        y, self.h_all, self.c_all = _multilayer_lstm_forward(
            x, self.w_all, self.b_all, self.h_all, self.c_all,
            h_last=self.layer_sizes[-1])
        return y


# ------------------------------- Reference -----------------------------------
def _ref_forward(x, params, hiddens):
    """Pure-JAX reference mirroring the kernel numerics: bf16 matmul operands,
    fp32 accumulation + fp32 cell state, bf16 hidden carry between layers."""
    bf = lambda a: a.astype(jnp.bfloat16).astype(jnp.float32)
    x = bf(x)
    for (w_ih, w_hh, b), (h, c) in zip(params, hiddens):
        H = h.shape[-1]
        gates = x @ bf(w_ih) + bf(h) @ bf(w_hh) + b
        i = jax.nn.sigmoid(gates[:, 0 * H:1 * H])
        f = jax.nn.sigmoid(gates[:, 1 * H:2 * H])
        g = jnp.tanh(gates[:, 2 * H:3 * H])
        o = jax.nn.sigmoid(gates[:, 3 * H:4 * H])
        c = f * c + i * g
        h = o * jnp.tanh(c)
        x = bf(h)
    return x


if __name__ == "__main__":
    key = jax.random.PRNGKey(0)
    key, kx = jax.random.split(key)

    batch, input_size = 2, 16
    layer_sizes = [32, 32]

    model = MultiLayerLSTM(input_size, layer_sizes, key)
    model.reset_hiddens(batch_size=batch)

    x = jax.random.normal(kx, (batch, input_size), jnp.float32)

    # Initial hidden states (zeros) for the reference, before the kernel updates them.
    ref_hiddens = [(jnp.zeros((batch, s), jnp.float32),
                    jnp.zeros((batch, s), jnp.float32)) for s in layer_sizes]

    out = model(x)
    out = jax.block_until_ready(out)

    ref = _ref_forward(x, model.params, ref_hiddens)
    assert out.shape == (batch, layer_sizes[-1])
    assert jnp.allclose(out, ref.astype(out.dtype), atol=1e-2, rtol=1e-2), \
        "mismatch vs reference"

    print("KERNEL_OK")
</pallas_src>

<mosaic_0001>
module attributes {stable_mosaic.version = 11 : i64} {
  func.func @_stacked_lstm_kernel(%arg0: i32, %arg1: memref<16x128xbf16, #tpu.memory_space<vmem>>, %arg2: memref<1x16x128xbf16, #tpu.memory_space<vmem>>, %arg3: memref<1x16x128xf32, #tpu.memory_space<vmem>>, %arg4: memref<1x256x512xbf16, #tpu.memory_space<vmem>>, %arg5: memref<1x1x512xf32, #tpu.memory_space<vmem>>, %arg6: memref<1x16x128xbf16, #tpu.memory_space<vmem>>, %arg7: memref<1x16x128xf32, #tpu.memory_space<vmem>>, %arg8: memref<16x256xbf16, #tpu.memory_space<vmem>>) attributes {dimension_semantics = [#tpu.dimension_semantics<arbitrary>], iteration_bounds = array<i64: 2>, scalar_prefetch = 0 : i64, scratch_operands = 1 : i64, tpu.core_type = #tpu.core_type<tc>, window_params = [{pipeline_mode = #tpu.pipeline_mode<synchronous>, transform_indices = @transform_0, window_bounds = array<i64: 16, 128>}, {transform_indices = @transform_1, window_bounds = array<i64: 1, 16, 128>}, {transform_indices = @transform_2, window_bounds = array<i64: 1, 16, 128>}, {transform_indices = @transform_3, window_bounds = array<i64: 1, 256, 512>}, {transform_indices = @transform_4, window_bounds = array<i64: 1, 1, 512>}, {transform_indices = @transform_5, window_bounds = array<i64: 1, 16, 128>}, {transform_indices = @transform_6, window_bounds = array<i64: 1, 16, 128>}]} {
    %c0_i32 = arith.constant 0 : i32
    %0 = arith.cmpi eq, %arg0, %c0_i32 : i32
    %1 = arith.extui %0 : i1 to i32
    %c0_i32_0 = arith.constant 0 : i32
    %2 = arith.cmpi ne, %1, %c0_i32_0 : i32
    scf.if %2 {
      %c0_26 = arith.constant 0 : index
      %c0_27 = arith.constant 0 : index
      %50 = vector.load %arg1[%c0_26, %c0_27] : memref<16x128xbf16, #tpu.memory_space<vmem>>, vector<16x128xbf16>
      %c0_28 = arith.constant 0 : index
      %c0_29 = arith.constant 0 : index
      %51 = vector.load %arg8[%c0_28, %c0_29] : memref<16x256xbf16, #tpu.memory_space<vmem>>, vector<16x128xbf16>
      tpu.vector_store %arg8[%c0_28, %c0_29], %50 {strides = array<i32>} : memref<16x256xbf16, #tpu.memory_space<vmem>>, vector<16x128xbf16>,
    } else {
    }
    %c0 = arith.constant 0 : index
    %c0_1 = arith.constant 0 : index
    %c0_2 = arith.constant 0 : index
    %3 = vector.load %arg2[%c0, %c0_1, %c0_2] : memref<1x16x128xbf16, #tpu.memory_space<vmem>>, vector<1x16x128xbf16>
    %4 = vector.shape_cast %3 : vector<1x16x128xbf16> to vector<16x128xbf16>
    %c0_3 = arith.constant 0 : index
    %c128 = arith.constant 128 : index
    %5 = vector.load %arg8[%c0_3, %c128] : memref<16x256xbf16, #tpu.memory_space<vmem>>, vector<16x128xbf16>
    tpu.vector_store %arg8[%c0_3, %c128], %4 {strides = array<i32>} : memref<16x256xbf16, #tpu.memory_space<vmem>>, vector<16x128xbf16>,
    %c0_4 = arith.constant 0 : index
    %c0_5 = arith.constant 0 : index
    %6 = vector.load %arg8[%c0_4, %c0_5] : memref<16x256xbf16, #tpu.memory_space<vmem>>, vector<16x256xbf16>
    %c0_6 = arith.constant 0 : index
    %c0_7 = arith.constant 0 : index
    %c0_8 = arith.constant 0 : index
    %7 = vector.load %arg4[%c0_6, %c0_7, %c0_8] : memref<1x256x512xbf16, #tpu.memory_space<vmem>>, vector<1x256x512xbf16>
    %8 = vector.shape_cast %7 : vector<1x256x512xbf16> to vector<256x512xbf16>
    %cst = arith.constant dense<0.000000e+00> : vector<16x512xf32>
    %9 = tpu.matmul %6, %8, %cst {dimension_numbers = #tpu.dot_dimension_numbers<[1], [0], [0], [1], [0, 0, 1, 1], [], []>} : vector<16x256xbf16>, vector<256x512xbf16>, vector<16x512xf32> -> vector<16x512xf32>
    %c0_9 = arith.constant 0 : index
    %c0_10 = arith.constant 0 : index
    %c0_11 = arith.constant 0 : index
    %10 = vector.load %arg5[%c0_9, %c0_10, %c0_11] : memref<1x1x512xf32, #tpu.memory_space<vmem>>, vector<1x1x512xf32>
    %11 = vector.shape_cast %10 : vector<1x1x512xf32> to vector<1x512xf32>
    %12 = vector.broadcast %11 : vector<1x512xf32> to vector<16x512xf32>
    %13 = arith.addf %9, %12 : vector<16x512xf32>
    %14 = vector.extract_strided_slice %13 {offsets = [0, 0], sizes = [16, 128], strides = [1, 1]} : vector<16x512xf32> to vector<16x128xf32>
    %15 = arith.negf %14 : vector<16x128xf32>
    %16 = math.exp %15 : vector<16x128xf32>
    %cst_12 = arith.constant 1.000000e+00 : f32
    %17 = vector.broadcast %cst_12 : f32 to vector<16x128xf32>
    %18 = arith.addf %17, %16 : vector<16x128xf32>
    %19 = arith.divf %17, %18 : vector<16x128xf32>
    %20 = vector.extract_strided_slice %13 {offsets = [0, 128], sizes = [16, 128], strides = [1, 1]} : vector<16x512xf32> to vector<16x128xf32>
    %21 = arith.negf %20 : vector<16x128xf32>
    %22 = math.exp %21 : vector<16x128xf32>
    %cst_13 = arith.constant 1.000000e+00 : f32
    %23 = vector.broadcast %cst_13 : f32 to vector<16x128xf32>
    %24 = arith.addf %23, %22 : vector<16x128xf32>
    %25 = arith.divf %23, %24 : vector<16x128xf32>
    %26 = vector.extract_strided_slice %13 {offsets = [0, 256], sizes = [16, 128], strides = [1, 1]} : vector<16x512xf32> to vector<16x128xf32>
    %27 = math.tanh %26 : vector<16x128xf32>
    %28 = vector.extract_strided_slice %13 {offsets = [0, 384], sizes = [16, 128], strides = [1, 1]} : vector<16x512xf32> to vector<16x128xf32>
    %29 = arith.negf %28 : vector<16x128xf32>
    %30 = math.exp %29 : vector<16x128xf32>
    %cst_14 = arith.constant 1.000000e+00 : f32
    %31 = vector.broadcast %cst_14 : f32 to vector<16x128xf32>
    %32 = arith.addf %31, %30 : vector<16x128xf32>
    %33 = arith.divf %31, %32 : vector<16x128xf32>
    %c0_15 = arith.constant 0 : index
    %c0_16 = arith.constant 0 : index
    %c0_17 = arith.constant 0 : index
    %34 = vector.load %arg3[%c0_15, %c0_16, %c0_17] : memref<1x16x128xf32, #tpu.memory_space<vmem>>, vector<1x16x128xf32>
    %35 = vector.shape_cast %34 : vector<1x16x128xf32> to vector<16x128xf32>
    %36 = arith.mulf %25, %35 : vector<16x128xf32>
    %37 = arith.mulf %19, %27 : vector<16x128xf32>
    %38 = arith.addf %36, %37 : vector<16x128xf32>
    %39 = math.tanh %38 : vector<16x128xf32>
    %40 = arith.mulf %33, %39 : vector<16x128xf32>
    %c0_18 = arith.constant 0 : index
    %c0_19 = arith.constant 0 : index
    %c0_20 = arith.constant 0 : index
    %41 = vector.load %arg7[%c0_18, %c0_19, %c0_20] : memref<1x16x128xf32, #tpu.memory_space<vmem>>, vector<1x16x128xf32>
    %42 = vector.shape_cast %41 : vector<1x16x128xf32> to vector<16x128xf32>
    %43 = vector.shape_cast %38 : vector<16x128xf32> to vector<1x16x128xf32>
    tpu.vector_store %arg7[%c0_18, %c0_19, %c0_20], %43 {strides = array<i32>} : memref<1x16x128xf32, #tpu.memory_space<vmem>>, vector<1x16x128xf32>,
    %44 = arith.truncf %40 : vector<16x128xf32> to vector<16x128xbf16>
    %c0_21 = arith.constant 0 : index
    %c0_22 = arith.constant 0 : index
    %c0_23 = arith.constant 0 : index
    %45 = vector.load %arg6[%c0_21, %c0_22, %c0_23] : memref<1x16x128xbf16, #tpu.memory_space<vmem>>, vector<1x16x128xbf16>
    %46 = vector.shape_cast %45 : vector<1x16x128xbf16> to vector<16x128xbf16>
    %47 = vector.shape_cast %44 : vector<16x128xbf16> to vector<1x16x128xbf16>
    tpu.vector_store %arg6[%c0_21, %c0_22, %c0_23], %47 {strides = array<i32>} : memref<1x16x128xbf16, #tpu.memory_space<vmem>>, vector<1x16x128xbf16>,
    %48 = arith.truncf %40 : vector<16x128xf32> to vector<16x128xbf16>
    %c0_24 = arith.constant 0 : index
    %c0_25 = arith.constant 0 : index
    %49 = vector.load %arg8[%c0_24, %c0_25] : memref<16x256xbf16, #tpu.memory_space<vmem>>, vector<16x128xbf16>
    tpu.vector_store %arg8[%c0_24, %c0_25], %48 {strides = array<i32>} : memref<16x256xbf16, #tpu.memory_space<vmem>>, vector<16x128xbf16>,
    return
  }
  func.func @transform_0(%arg0: i32) -> (i32, i32) {
    %c0_i32 = arith.constant 0 : i32
    %c0_i32_0 = arith.constant 0 : i32
    %c0_i32_1 = arith.constant 0 : i32
    return %c0_i32, %c0_i32_0 : i32, i32
  }
  func.func @transform_1(%arg0: i32) -> (i32, i32, i32) {
    %c0_i32 = arith.constant 0 : i32
    %c0_i32_0 = arith.constant 0 : i32
    %c0_i32_1 = arith.constant 0 : i32
    return %arg0, %c0_i32, %c0_i32_0 : i32, i32, i32
  }
  func.func @transform_2(%arg0: i32) -> (i32, i32, i32) {
    %c0_i32 = arith.constant 0 : i32
    %c0_i32_0 = arith.constant 0 : i32
    %c0_i32_1 = arith.constant 0 : i32
    return %arg0, %c0_i32, %c0_i32_0 : i32, i32, i32
  }
  func.func @transform_3(%arg0: i32) -> (i32, i32, i32) {
    %c0_i32 = arith.constant 0 : i32
    %c0_i32_0 = arith.constant 0 : i32
    %c0_i32_1 = arith.constant 0 : i32
    return %arg0, %c0_i32, %c0_i32_0 : i32, i32, i32
  }
  func.func @transform_4(%arg0: i32) -> (i32, i32, i32) {
    %c0_i32 = arith.constant 0 : i32
    %c0_i32_0 = arith.constant 0 : i32
    %c0_i32_1 = arith.constant 0 : i32
    return %arg0, %c0_i32, %c0_i32_0 : i32, i32, i32
  }
  func.func @transform_5(%arg0: i32) -> (i32, i32, i32) {
    %c0_i32 = arith.constant 0 : i32
    %c0_i32_0 = arith.constant 0 : i32
    %c0_i32_1 = arith.constant 0 : i32
    return %arg0, %c0_i32, %c0_i32_0 : i32, i32, i32
  }
  func.func @transform_6(%arg0: i32) -> (i32, i32, i32) {
    %c0_i32 = arith.constant 0 : i32
    %c0_i32_0 = arith.constant 0 : i32
    %c0_i32_1 = arith.constant 0 : i32
    return %arg0, %c0_i32, %c0_i32_0 : i32, i32, i32
  }
}

</mosaic_0001>

<llo_original>
// kernel: _multilayer_lstm_forward.1
$region0: #{_multilayer_lstm_forward.1}
  #allocation0 [shape = 'u32[]', space=smem, size = 0x4, offset = 0x4, fixed_abs, tag = 'smem constant byte address 0x4 - core index']
  #allocation1 [shape = 'u32[144,128]{1,0:T(1,128)}', space=vmem, size = 0x12000, scoped, tag = 'internal scratch']
  #allocation2 [shape = 'bf16[16,256]{1,0:T(16,128)(2,1)}', space=vmem, size = 0x2000, scoped, tag = 'scratch operand']
  %s0 = inlined_call_operand.vmem [shape: bf16[16,128], index: 0, kind: input, shape index: {}]
  %s1 = inlined_call_operand.vmem [shape: bf16[2,16,128], index: 1, kind: input, shape index: {}, may-alias: {1,5}]
  %s2 = inlined_call_operand.vmem [shape: f32[2,16,128], index: 2, kind: input, shape index: {}, may-alias: {2,6}]
  %s3 = inlined_call_operand.hbm [shape: bf16[2,256,512], index: 3, kind: input, shape index: {}]
  %s4 = inlined_call_operand.vmem [shape: f32[2,1,512], index: 4, kind: input, shape index: {}]
  %s5 = inlined_call_operand.vmem [shape: bf16[2,16,128], index: 5, kind: output, shape index: {0}, may-alias: {1,5}]
  %s6 = inlined_call_operand.vmem [shape: f32[2,16,128], index: 6, kind: output, shape index: {1}, may-alias: {2,6}]
  %7 = xla_tuple %s5, %s6
  %s8 = sld [smem:[#allocation0]]
  $region69: #{_multilayer_lstm_forward.1} parent=0
    _
  %s10 = ssub.s32 1, %s8
  %s11 = scalar_select 0, %s10, %s8
  $region1: #{_multilayer_lstm_forward.1} parent=0
    #allocation3 [shape = 'u8[524288]{0}', space=vmem, size = 0x80000, scoped, tag = 'input window, operand 3']
    #allocation4 [shape = 's32[2]{0}', space=sflag, size = 0x8, scoped, tag = 'scoped memory for _multilayer_lstm_forward.1']
    %12 = vsyncpa [#allocation4], 0
    %s13 = scalar_lea.sflag [#allocation4], 1
    %14 = vsyncpa %s13, 0
    loop: start=0, step=1, limit=4
    $region2: #{_multilayer_lstm_forward.1} parent=1 // loop_pre_header
      _
    $region3: #{_multilayer_lstm_forward.1} parent=1 // loop_header
      %s16 = sphi 0, %s20
      %p17 = scmp.ge.s32.totalorder %s16, 4
      %s24 = sphi 0, %s24
      %s26 = sphi 0, %s24
      %s27 = sphi 0, %s26
      %s41 = sphi 0, %s27
      %s47 = sphi 0, %s49
      %s50 = sphi 0, %s47
      %s51 = sphi 0, %s50
      %s67 = sphi 0, %s51
      %s73 = sphi 0, %s75
      %s76 = sphi 0, %s73
      %s77 = sphi 0, %s76
      %s93 = sphi 0, %s77
      %s99 = sphi 0, %s101
      %s102 = sphi 0, %s99
      %s103 = sphi 0, %s102
      %s119 = sphi 0, %s103
      %s125 = sphi 0, %s127
      %s128 = sphi 0, %s125
      %s129 = sphi 0, %s128
      %s145 = sphi 0, %s129
      %s151 = sphi 0, %s153
      %s154 = sphi 0, %s151
      %s155 = sphi 0, %s154
      %s171 = sphi 0, %s155
      %s177 = sphi 0, %s179
      %s180 = sphi 0, %s177
      %s181 = sphi 0, %s180
      %s197 = sphi 0, %s181
    $region4: #{_multilayer_lstm_forward.1} parent=1 // loop_header_branch
      %19 = sbr.rel (%p17) target = $region8
    $region5: #{_multilayer_lstm_forward.1} parent=1 // loop_body
      %s21 = ssub.s32 %s16, 1
      %s22 = ssub.s32 %s16, 2
      %s23 = sadd.s32 %s16, 1
      %s25 = sadd.s32 %s24, 1
      %p28 = scmp.eq.s32.totalorder %s16, 1
      %p29 = scmp.ne.s32.totalorder %s24, %s26
      %p30 = scmp.eq.s32.totalorder %s16, 0
      %p31 = por %p29, %p30
      %p32 = scmp.ne.s32.totalorder %s24, %s26
      %p33 = scmp.eq.s32.totalorder %s21, 1
      %p34 = por %p32, %p33
      %p35 = scmp.ne.s32.totalorder %s26, %s27
      %p36 = scmp.eq.s32.totalorder %s21, 0
      %p37 = por %p35, %p36
      %p38 = scmp.ne.s32.totalorder %s26, %s27
      %p39 = scmp.eq.s32.totalorder %s22, 1
      %p40 = por %p38, %p39
      %p42 = scmp.ne.s32.totalorder %s27, %s41
      %p43 = scmp.eq.s32.totalorder %s22, 0
      %p44 = por %p42, %p43
      %s45 = ssub.s32 %s16, %s23
      %p46 = scmp.eq.s32.totalorder %s45, 0
      %s48 = sadd.s32 %s47, 1
      %s49 = scalar_select %p46, %s47, %s48
      %p52 = pneg %p46
      %p53 = scmp.eq.s32.totalorder %s16, 1
      %p54 = por %p52, %p53
      %p55 = scmp.ne.s32.totalorder %s47, %s50
      %p56 = scmp.eq.s32.totalorder %s16, 0
      %p57 = por %p55, %p56
      %p58 = scmp.ne.s32.totalorder %s47, %s50
      %p59 = scmp.eq.s32.totalorder %s21, 1
      %p60 = por %p58, %p59
      %p61 = scmp.ne.s32.totalorder %s50, %s51
      %p62 = scmp.eq.s32.totalorder %s21, 0
      %p63 = por %p61, %p62
      %p64 = scmp.ne.s32.totalorder %s50, %s51
      %p65 = scmp.eq.s32.totalorder %s22, 1
      %p66 = por %p64, %p65
      %p68 = scmp.ne.s32.totalorder %s51, %s67
      %p69 = scmp.eq.s32.totalorder %s22, 0
      %p70 = por %p68, %p69
      %s71 = ssub.s32 %s16, %s23
      %p72 = scmp.eq.s32.totalorder %s71, 0
      %s74 = sadd.s32 %s73, 1
      %s75 = scalar_select %p72, %s73, %s74
      %p78 = pneg %p72
      %p79 = scmp.eq.s32.totalorder %s16, 1
      %p80 = por %p78, %p79
      %p81 = scmp.ne.s32.totalorder %s73, %s76
      %p82 = scmp.eq.s32.totalorder %s16, 0
      %p83 = por %p81, %p82
      %p84 = scmp.ne.s32.totalorder %s73, %s76
      %p85 = scmp.eq.s32.totalorder %s21, 1
      %p86 = por %p84, %p85
      %p87 = scmp.ne.s32.totalorder %s76, %s77
      %p88 = scmp.eq.s32.totalorder %s21, 0
      %p89 = por %p87, %p88
      %p90 = scmp.ne.s32.totalorder %s76, %s77
      %p91 = scmp.eq.s32.totalorder %s22, 1
      %p92 = por %p90, %p91
      %p94 = scmp.ne.s32.totalorder %s77, %s93
      %p95 = scmp.eq.s32.totalorder %s22, 0
      %p96 = por %p94, %p95
      %s97 = ssub.s32 %s16, %s23
      %p98 = scmp.eq.s32.totalorder %s97, 0
      %s100 = sadd.s32 %s99, 1
      %s101 = scalar_select %p98, %s99, %s100
      %p104 = pneg %p98
      %p105 = scmp.eq.s32.totalorder %s16, 1
      %p106 = por %p104, %p105
      %p107 = scmp.ne.s32.totalorder %s99, %s102
      %p108 = scmp.eq.s32.totalorder %s16, 0
      %p109 = por %p107, %p108
      %p110 = scmp.ne.s32.totalorder %s99, %s102
      %p111 = scmp.eq.s32.totalorder %s21, 1
      %p112 = por %p110, %p111
      %p113 = scmp.ne.s32.totalorder %s102, %s103
      %p114 = scmp.eq.s32.totalorder %s21, 0
      %p115 = por %p113, %p114
      %p116 = scmp.ne.s32.totalorder %s102, %s103
      %p117 = scmp.eq.s32.totalorder %s22, 1
      %p118 = por %p116, %p117
      %p120 = scmp.ne.s32.totalorder %s103, %s119
      %p121 = scmp.eq.s32.totalorder %s22, 0
      %p122 = por %p120, %p121
      %s123 = ssub.s32 %s16, %s23
      %p124 = scmp.eq.s32.totalorder %s123, 0
      %s126 = sadd.s32 %s125, 1
      %s127 = scalar_select %p124, %s125, %s126
      %p130 = pneg %p124
      %p131 = scmp.eq.s32.totalorder %s16, 1
      %p132 = por %p130, %p131
      %p133 = scmp.ne.s32.totalorder %s125, %s128
      %p134 = scmp.eq.s32.totalorder %s16, 0
      %p135 = por %p133, %p134
      %p136 = scmp.ne.s32.totalorder %s125, %s128
      %p137 = scmp.eq.s32.totalorder %s21, 1
      %p138 = por %p136, %p137
      %p139 = scmp.ne.s32.totalorder %s128, %s129
      %p140 = scmp.eq.s32.totalorder %s21, 0
      %p141 = por %p139, %p140
      %p142 = scmp.ne.s32.totalorder %s128, %s129
      %p143 = scmp.eq.s32.totalorder %s22, 1
      %p144 = por %p142, %p143
      %p146 = scmp.ne.s32.totalorder %s129, %s145
      %p147 = scmp.eq.s32.totalorder %s22, 0
      %p148 = por %p146, %p147
      %s149 = ssub.s32 %s16, %s23
      %p150 = scmp.eq.s32.totalorder %s149, 0
      %s152 = sadd.s32 %s151, 1
      %s153 = scalar_select %p150, %s151, %s152
      %p156 = pneg %p150
      %p157 = scmp.eq.s32.totalorder %s16, 1
      %p158 = por %p156, %p157
      %p159 = scmp.ne.s32.totalorder %s151, %s154
      %p160 = scmp.eq.s32.totalorder %s16, 0
      %p161 = por %p159, %p160
      %p162 = scmp.ne.s32.totalorder %s151, %s154
      %p163 = scmp.eq.s32.totalorder %s21, 1
      %p164 = por %p162, %p163
      %p165 = scmp.ne.s32.totalorder %s154, %s155
      %p166 = scmp.eq.s32.totalorder %s21, 0
      %p167 = por %p165, %p166
      %p168 = scmp.ne.s32.totalorder %s154, %s155
      %p169 = scmp.eq.s32.totalorder %s22, 1
      %p170 = por %p168, %p169
      %p172 = scmp.ne.s32.totalorder %s155, %s171
      %p173 = scmp.eq.s32.totalorder %s22, 0
      %p174 = por %p172, %p173
      %s175 = ssub.s32 %s16, %s23
      %p176 = scmp.eq.s32.totalorder %s175, 0
      %s178 = sadd.s32 %s177, 1
      %s179 = scalar_select %p176, %s177, %s178
      %p182 = pneg %p176
      %p183 = scmp.eq.s32.totalorder %s16, 1
      %p184 = por %p182, %p183
      %p185 = scmp.ne.s32.totalorder %s177, %s180
      %p186 = scmp.eq.s32.totalorder %s16, 0
      %p187 = por %p185, %p186
      %p188 = scmp.ne.s32.totalorder %s177, %s180
      %p189 = scmp.eq.s32.totalorder %s21, 1
      %p190 = por %p188, %p189
      %p191 = scmp.ne.s32.totalorder %s180, %s181
      %p192 = scmp.eq.s32.totalorder %s21, 0
      %p193 = por %p191, %p192
      %p194 = scmp.ne.s32.totalorder %s180, %s181
      %p195 = scmp.eq.s32.totalorder %s22, 1
      %p196 = por %p194, %p195
      %p198 = scmp.ne.s32.totalorder %s181, %s197
      %p199 = scmp.eq.s32.totalorder %s22, 0
      %p200 = por %p198, %p199
      %p201 = scmp.le.s32.totalorder 1, %s16
      %p202 = scmp.lt.s32.totalorder %s16, 3
      %p203 = pnand %p201, %p202
      %p204 = pneg %p203
      // Predicated region
      $region9: #{_multilayer_lstm_forward.1} parent=5 // pred_check
        _
      $region10: #{_multilayer_lstm_forward.1} parent=5 // pred_check_branch
        %206 = sbr.rel (%p203) target = $region12
      $region11: #{_multilayer_lstm_forward.1} parent=5 // pred_region
        %s207 = ssub.s32 %s16, 1
        // Predicated region
        $region13: #{_multilayer_lstm_forward.1} parent=11 // pred_check
          %p208 = pneg %p37
        $region14: #{_multilayer_lstm_forward.1} parent=11 // pred_check_branch
          %210 = sbr.rel (%p208) target = $region16
        $region15: #{_multilayer_lstm_forward.1} parent=11 // pred_region
          _
        $region16: #{_multilayer_lstm_forward.1} parent=11 // pred_fallthru
          _
      $region12: #{_multilayer_lstm_forward.1} parent=5 // pred_fallthru
        _
      %p211 = scmp.lt.s32.totalorder %s16, 2
      // Predicated region
      $region17: #{_multilayer_lstm_forward.1} parent=5 // pred_check
        %p212 = pneg %p211
      $region18: #{_multilayer_lstm_forward.1} parent=5 // pred_check_branch
        %214 = sbr.rel (%p212) target = $region20
      $region19: #{_multilayer_lstm_forward.1} parent=5 // pred_region
        // Predicated region
        $region21: #{_multilayer_lstm_forward.1} parent=19 // pred_check
          %p215 = pneg %p57
        $region22: #{_multilayer_lstm_forward.1} parent=19 // pred_check_branch
          %217 = sbr.rel (%p215) target = $region24
        $region23: #{_multilayer_lstm_forward.1} parent=19 // pred_region
          %p218 = scmp.lt.s32.totalorder %s16, 1
          %s219 = scalar_select %p218, %s16, 1
          %s220 = smul.addr %s219, 2
          %s221 = smul.addr %s220, 4
          %s222 = scalar_lea.vmem %s1, %s221
        $region24: #{_multilayer_lstm_forward.1} parent=19 // pred_fallthru
          _
        // Predicated region
        $region25: #{_multilayer_lstm_forward.1} parent=19 // pred_check
          %p223 = pneg %p83
        $region26: #{_multilayer_lstm_forward.1} parent=19 // pred_check_branch
          %225 = sbr.rel (%p223) target = $region28
        $region27: #{_multilayer_lstm_forward.1} parent=19 // pred_region
          %p226 = scmp.lt.s32.totalorder %s16, 1
          %s227 = scalar_select %p226, %s16, 1
          %s228 = smul.addr %s227, 2
          %s229 = smul.addr %s228, 8
          %s230 = scalar_lea.vmem %s2, %s229
        $region28: #{_multilayer_lstm_forward.1} parent=19 // pred_fallthru
          _
        // Predicated region
        $region29: #{_multilayer_lstm_forward.1} parent=19 // pred_check
          %p231 = pneg %p109
        $region30: #{_multilayer_lstm_forward.1} parent=19 // pred_check_branch
          %233 = sbr.rel (%p231) target = $region32
        $region31: #{_multilayer_lstm_forward.1} parent=19 // pred_region
          %s234 = sand.u32 %s99, 1
          %s235 = scalar_lea.sflag [#allocation4], %s234
          %s236 = sand.u32 %s99, 1
          %s237 = smul.addr %s236, 512
          %s238 = scalar_lea.vmem [#allocation3], %s237
          %s240 = ssub.s32 8192, 8192
          %241 = vsyncadd %s235, %s240
          %s242 = smul.addr %s16, 128
          %s243 = smul.addr %s242, 64
          %s244 = scalar_lea.hbm %s3, %s243
          %s245 = sshll.u32 %s238, 4
          %s246 = int_to_ptr.vmem [resolvable:$true] %s245
          %251 = dma.hbm_to_vmem [thread:$0]  %s244, 8192, %s246, %s235, 256, 256, 16
        $region32: #{_multilayer_lstm_forward.1} parent=19 // pred_fallthru
          _
        // Predicated region
        $region33: #{_multilayer_lstm_forward.1} parent=19 // pred_check
          %p252 = pneg %p135
        $region34: #{_multilayer_lstm_forward.1} parent=19 // pred_check_branch
          %254 = sbr.rel (%p252) target = $region36
        $region35: #{_multilayer_lstm_forward.1} parent=19 // pred_region
          %p255 = scmp.lt.s32.totalorder %s16, 1
          %s256 = scalar_select %p255, %s16, 1
          %s257 = smul.addr %s256, 4
          %s258 = scalar_lea.vmem %s4, %s257
        $region36: #{_multilayer_lstm_forward.1} parent=19 // pred_fallthru
          _
      $region20: #{_multilayer_lstm_forward.1} parent=5 // pred_fallthru
        _
      %p259 = scmp.le.s32.totalorder 1, %s16
      %p260 = scmp.lt.s32.totalorder %s16, 3
      %p261 = pnand %p259, %p260
      %p262 = pneg %p261
      // Predicated region
      $region37: #{_multilayer_lstm_forward.1} parent=5 // pred_check
        _
      $region38: #{_multilayer_lstm_forward.1} parent=5 // pred_check_branch
        %264 = sbr.rel (%p261) target = $region40
      $region39: #{_multilayer_lstm_forward.1} parent=5 // pred_region
        %s265 = ssub.s32 %s16, 1
        %s266 = sand.u32 %s102, 1
        %s267 = scalar_lea.sflag [#allocation4], %s266
        %s268 = sand.u32 %s102, 1
        %s269 = smul.addr %s268, 512
        %s270 = scalar_lea.vmem [#allocation3], %s269
        // Predicated region
        $region41: #{_multilayer_lstm_forward.1} parent=39 // pred_check
          %p271 = pneg %p115
        $region42: #{_multilayer_lstm_forward.1} parent=39 // pred_check_branch
          %273 = sbr.rel (%p271) target = $region44
        $region43: #{_multilayer_lstm_forward.1} parent=39 // pred_region
          %274 = dma.done %s267, 8192
        $region44: #{_multilayer_lstm_forward.1} parent=39 // pred_fallthru
          _
        %p275 = pneg %p37
        %p276 = pneg %p34
        %p277 = scmp.lt.s32.totalorder %s21, 1
        %s278 = scalar_select %p277, %s21, 1
        %s279 = smul.addr %s278, 2
        %s280 = smul.addr %s279, 4
        %s281 = scalar_lea.vmem %s1, %s280
        %p282 = pneg %p63
        %p283 = pneg %p60
        %p284 = scmp.lt.s32.totalorder %s21, 1
        %s285 = scalar_select %p284, %s21, 1
        %s286 = smul.addr %s285, 2
        %s287 = smul.addr %s286, 8
        %s288 = scalar_lea.vmem %s2, %s287
        %p289 = pneg %p89
        %p290 = pneg %p86
        %s291 = sand.u32 %s102, 1
        %s292 = scalar_lea.sflag [#allocation4], %s291
        %s293 = sand.u32 %s102, 1
        %s294 = smul.addr %s293, 512
        %s295 = scalar_lea.vmem [#allocation3], %s294
        %p296 = pneg %p115
        %p297 = pneg %p112
        %p298 = scmp.lt.s32.totalorder %s21, 1
        %s299 = scalar_select %p298, %s21, 1
        %s300 = smul.addr %s299, 4
        %s301 = scalar_lea.vmem %s4, %s300
        %p302 = pneg %p141
        %p303 = pneg %p138
        %p304 = pneg %p167
        %p305 = pneg %p164
        %p306 = scmp.lt.s32.totalorder %s21, 1
        %s307 = scalar_select %p306, %s21, 1
        %s308 = smul.addr %s307, 2
        %s309 = smul.addr %s308, 4
        %s310 = scalar_lea.vmem %s5, %s309
        %p311 = pneg %p193
        %p312 = pneg %p190
        %p313 = scmp.lt.s32.totalorder %s21, 1
        %s314 = scalar_select %p313, %s21, 1
        %s315 = smul.addr %s314, 2
        %s316 = smul.addr %s315, 8
        %s317 = scalar_lea.vmem %s6, %s316
        %p318 = scmp.lt.s32.totalorder %s21, 1
        %s319 = scalar_select %p318, %s21, 1
        %s320 = smul.addr %s319, 2
        %s321 = smul.addr %s320, 4
        %s322 = scalar_lea.vmem %s1, %s321
        %p323 = scmp.lt.s32.totalorder %s21, 1
        %s324 = scalar_select %p323, %s21, 1
        %s325 = smul.addr %s324, 2
        %s326 = smul.addr %s325, 8
        %s327 = scalar_lea.vmem %s2, %s326
        %p328 = scmp.lt.s32.totalorder %s21, 1
        %s329 = scalar_select %p328, %s21, 1
        %s330 = smul.addr %s329, 4
        %s331 = scalar_lea.vmem %s4, %s330
        %p332 = scmp.lt.s32.totalorder %s21, 1
        %s333 = scalar_select %p332, %s21, 1
        %s334 = smul.addr %s333, 2
        %s335 = smul.addr %s334, 4
        %s336 = scalar_lea.vmem %s5, %s335
        %p337 = scmp.lt.s32.totalorder %s21, 1
        %s338 = scalar_select %p337, %s21, 1
        %s339 = smul.addr %s338, 2
        %s340 = smul.addr %s339, 8
        %s341 = scalar_lea.vmem %s6, %s340
        %p342 = scmp.eq.s32.totalorder %s21, 0
        // Predicated region
        $region45: #{_multilayer_lstm_forward.1} parent=39 // pred_check
          %p343 = pneg %p342
        $region46: #{_multilayer_lstm_forward.1} parent=39 // pred_check_branch
          %345 = sbr.rel (%p343) target = $region48
        $region47: #{_multilayer_lstm_forward.1} parent=39 // pred_region
          %v346 = vld [vmem:[%s0] sm:$0xf]
          %v347 = vld [vmem:[%s0 + $0x4] sm:$0xf]
          %v350 = vunpack.c.l.b16 %v346
          %v351 = vunpack.c.l.b16 %v347
          %v352 = vpack.c.b16 %v351, %v350
          %354 = vst [vmem:[#allocation2] sm:$0xff] %v352
        $region48: #{_multilayer_lstm_forward.1} parent=39 // pred_fallthru
          _
        %v355 = vld [vmem:[%s322] sm:$0xf]
        %v356 = vld [vmem:[%s322 + $0x4] sm:$0xf]
        %v359 = vunpack.c.l.b16 %v355
        %v360 = vunpack.c.l.b16 %v356
        %v361 = vpack.c.b16 %v360, %v359
        %363 = vst [vmem:[#allocation2 + $0x8] sm:$0xff] %v361
        %v364 = vld [vmem:[#allocation2] sm:$0xff]
        %v365 = vld [vmem:[#allocation2 + $0x8] sm:$0xff]
        %v366 = vld [vmem:[%s270] sm:$0xff]
        %v367 = vld [vmem:[%s270 + $0x8] sm:$0xff]
        %v368 = vld [vmem:[%s270 + $0x10] sm:$0xff]
        %v369 = vld [vmem:[%s270 + $0x18] sm:$0xff]
        %v370 = vld [vmem:[%s270 + $0x20] sm:$0xff]
        %v371 = vld [vmem:[%s270 + $0x28] sm:$0xff]
        %v372 = vld [vmem:[%s270 + $0x30] sm:$0xff]
        %v373 = vld [vmem:[%s270 + $0x38] sm:$0xff]
        %v374 = vld [vmem:[%s270 + $0x40] sm:$0xff]
        %v375 = vld [vmem:[%s270 + $0x48] sm:$0xff]
        %v376 = vld [vmem:[%s270 + $0x50] sm:$0xff]
        %v377 = vld [vmem:[%s270 + $0x58] sm:$0xff]
        %v378 = vld [vmem:[%s270 + $0x60] sm:$0xff]
        %v379 = vld [vmem:[%s270 + $0x68] sm:$0xff]
        %v380 = vld [vmem:[%s270 + $0x70] sm:$0xff]
        %v381 = vld [vmem:[%s270 + $0x78] sm:$0xff]
        %v382 = vld [vmem:[%s270 + $0x80] sm:$0xff]
        %v383 = vld [vmem:[%s270 + $0x88] sm:$0xff]
        %v384 = vld [vmem:[%s270 + $0x90] sm:$0xff]
        %v385 = vld [vmem:[%s270 + $0x98] sm:$0xff]
        %v386 = vld [vmem:[%s270 + $0xa0] sm:$0xff]
        %v387 = vld [vmem:[%s270 + $0xa8] sm:$0xff]
        %v388 = vld [vmem:[%s270 + $0xb0] sm:$0xff]
        %v389 = vld [vmem:[%s270 + $0xb8] sm:$0xff]
        %v390 = vld [vmem:[%s270 + $0xc0] sm:$0xff]
        %v391 = vld [vmem:[%s270 + $0xc8] sm:$0xff]
        %v392 = vld [vmem:[%s270 + $0xd0] sm:$0xff]
        %v393 = vld [vmem:[%s270 + $0xd8] sm:$0xff]
        %v394 = vld [vmem:[%s270 + $0xe0] sm:$0xff]
        %v395 = vld [vmem:[%s270 + $0xe8] sm:$0xff]
        %v396 = vld [vmem:[%s270 + $0xf0] sm:$0xff]
        %v397 = vld [vmem:[%s270 + $0xf8] sm:$0xff]
        %v398 = vld [vmem:[%s270 + $0x100] sm:$0xff]
        %v399 = vld [vmem:[%s270 + $0x108] sm:$0xff]
        %v400 = vld [vmem:[%s270 + $0x110] sm:$0xff]
        %v401 = vld [vmem:[%s270 + $0x118] sm:$0xff]
        %v402 = vld [vmem:[%s270 + $0x120] sm:$0xff]
        %v403 = vld [vmem:[%s270 + $0x128] sm:$0xff]
        %v404 = vld [vmem:[%s270 + $0x130] sm:$0xff]
        %v405 = vld [vmem:[%s270 + $0x138] sm:$0xff]
        %v406 = vld [vmem:[%s270 + $0x140] sm:$0xff]
        %v407 = vld [vmem:[%s270 + $0x148] sm:$0xff]
        %v408 = vld [vmem:[%s270 + $0x150] sm:$0xff]
        %v409 = vld [vmem:[%s270 + $0x158] sm:$0xff]
        %v410 = vld [vmem:[%s270 + $0x160] sm:$0xff]
        %v411 = vld [vmem:[%s270 + $0x168] sm:$0xff]
        %v412 = vld [vmem:[%s270 + $0x170] sm:$0xff]
        %v413 = vld [vmem:[%s270 + $0x178] sm:$0xff]
        %v414 = vld [vmem:[%s270 + $0x180] sm:$0xff]
        %v415 = vld [vmem:[%s270 + $0x188] sm:$0xff]
        %v416 = vld [vmem:[%s270 + $0x190] sm:$0xff]
        %v417 = vld [vmem:[%s270 + $0x198] sm:$0xff]
        %v418 = vld [vmem:[%s270 + $0x1a0] sm:$0xff]
        %v419 = vld [vmem:[%s270 + $0x1a8] sm:$0xff]
        %v420 = vld [vmem:[%s270 + $0x1b0] sm:$0xff]
        %v421 = vld [vmem:[%s270 + $0x1b8] sm:$0xff]
        %v422 = vld [vmem:[%s270 + $0x1c0] sm:$0xff]
        %v423 = vld [vmem:[%s270 + $0x1c8] sm:$0xff]
        %v424 = vld [vmem:[%s270 + $0x1d0] sm:$0xff]
        %v425 = vld [vmem:[%s270 + $0x1d8] sm:$0xff]
        %v426 = vld [vmem:[%s270 + $0x1e0] sm:$0xff]
        %v427 = vld [vmem:[%s270 + $0x1e8] sm:$0xff]
        %v428 = vld [vmem:[%s270 + $0x1f0] sm:$0xff]
        %v429 = vld [vmem:[%s270 + $0x1f8] sm:$0xff]
        %v430 = vld [vmem:[%s331] sm:$0xf]
        %v432 = vlaneseq
        %v433 = vshrl.u32 %v432, 7
        %v434 = vsub.s32 0, %v433
        %v435 = vrot.slane %v430, %v434
        %v436 = vlaneseq
        %v437 = vshrl.u32 %v436, 7
        %v438 = vsub.s32 1, %v437
        %v439 = vrot.slane %v430, %v438
        %v440 = vlaneseq
        %v441 = vshrl.u32 %v440, 7
        %v442 = vsub.s32 2, %v441
        %v443 = vrot.slane %v430, %v442
        %v444 = vlaneseq
        %v445 = vshrl.u32 %v444, 7
        %v446 = vsub.s32 3, %v445
        %v447 = vrot.slane %v430, %v446
        %v516 = vunpack.c.l.b16 %v366
        %v517 = vunpack.c.h.b16 %v366
        %v518 = vunpack.c.l.b16 %v367
        %v519 = vunpack.c.h.b16 %v367
        %v520 = vunpack.c.l.b16 %v368
        %v521 = vunpack.c.h.b16 %v368
        %v522 = vunpack.c.l.b16 %v369
        %v523 = vunpack.c.h.b16 %v369
        %v524 = vunpack.c.l.b16 %v370
        %v525 = vunpack.c.h.b16 %v370
        %v526 = vunpack.c.l.b16 %v371
        %v527 = vunpack.c.h.b16 %v371
        %v528 = vunpack.c.l.b16 %v372
        %v529 = vunpack.c.h.b16 %v372
        %v530 = vunpack.c.l.b16 %v373
        %v531 = vunpack.c.h.b16 %v373
        %v532 = vunpack.c.l.b16 %v374
        %v533 = vunpack.c.h.b16 %v374
        %v534 = vunpack.c.l.b16 %v375
        %v535 = vunpack.c.h.b16 %v375
        %v536 = vunpack.c.l.b16 %v376
        %v537 = vunpack.c.h.b16 %v376
        %v538 = vunpack.c.l.b16 %v377
        %v539 = vunpack.c.h.b16 %v377
        %v540 = vunpack.c.l.b16 %v378
        %v541 = vunpack.c.h.b16 %v378
        %v542 = vunpack.c.l.b16 %v379
        %v543 = vunpack.c.h.b16 %v379
        %v544 = vunpack.c.l.b16 %v380
        %v545 = vunpack.c.h.b16 %v380
        %v546 = vunpack.c.l.b16 %v381
        %v547 = vunpack.c.h.b16 %v381
        %v548 = vunpack.c.l.b16 %v382
        %v549 = vunpack.c.h.b16 %v382
        %v550 = vunpack.c.l.b16 %v383
        %v551 = vunpack.c.h.b16 %v383
        %v552 = vunpack.c.l.b16 %v384
        %v553 = vunpack.c.h.b16 %v384
        %v554 = vunpack.c.l.b16 %v385
        %v555 = vunpack.c.h.b16 %v385
        %v556 = vunpack.c.l.b16 %v386
        %v557 = vunpack.c.h.b16 %v386
        %v558 = vunpack.c.l.b16 %v387
        %v559 = vunpack.c.h.b16 %v387
        %v560 = vunpack.c.l.b16 %v388
        %v561 = vunpack.c.h.b16 %v388
        %v562 = vunpack.c.l.b16 %v389
        %v563 = vunpack.c.h.b16 %v389
        %v564 = vunpack.c.l.b16 %v390
        %v565 = vunpack.c.h.b16 %v390
        %v566 = vunpack.c.l.b16 %v391
        %v567 = vunpack.c.h.b16 %v391
        %v568 = vunpack.c.l.b16 %v392
        %v569 = vunpack.c.h.b16 %v392
        %v570 = vunpack.c.l.b16 %v393
        %v571 = vunpack.c.h.b16 %v393
        %v572 = vunpack.c.l.b16 %v394
        %v573 = vunpack.c.h.b16 %v394
        %v574 = vunpack.c.l.b16 %v395
        %v575 = vunpack.c.h.b16 %v395
        %v576 = vunpack.c.l.b16 %v396
        %v577 = vunpack.c.h.b16 %v396
        %v578 = vunpack.c.l.b16 %v397
        %v579 = vunpack.c.h.b16 %v397
        %v580 = vunpack.c.l.b16 %v398
        %v581 = vunpack.c.h.b16 %v398
        %v582 = vunpack.c.l.b16 %v399
        %v583 = vunpack.c.h.b16 %v399
        %v584 = vunpack.c.l.b16 %v400
        %v585 = vunpack.c.h.b16 %v400
        %v586 = vunpack.c.l.b16 %v401
        %v587 = vunpack.c.h.b16 %v401
        %v588 = vunpack.c.l.b16 %v402
        %v589 = vunpack.c.h.b16 %v402
        %v590 = vunpack.c.l.b16 %v403
        %v591 = vunpack.c.h.b16 %v403
        %v592 = vunpack.c.l.b16 %v404
        %v593 = vunpack.c.h.b16 %v404
        %v594 = vunpack.c.l.b16 %v405
        %v595 = vunpack.c.h.b16 %v405
        %v596 = vunpack.c.l.b16 %v406
        %v597 = vunpack.c.h.b16 %v406
        %v598 = vunpack.c.l.b16 %v407
        %v599 = vunpack.c.h.b16 %v407
        %v600 = vunpack.c.l.b16 %v408
        %v601 = vunpack.c.h.b16 %v408
        %v602 = vunpack.c.l.b16 %v409
        %v603 = vunpack.c.h.b16 %v409
        %v604 = vunpack.c.l.b16 %v410
        %v605 = vunpack.c.h.b16 %v410
        %v606 = vunpack.c.l.b16 %v411
        %v607 = vunpack.c.h.b16 %v411
        %v608 = vunpack.c.l.b16 %v412
        %v609 = vunpack.c.h.b16 %v412
        %v610 = vunpack.c.l.b16 %v413
        %v611 = vunpack.c.h.b16 %v413
        %v612 = vunpack.c.l.b16 %v414
        %v613 = vunpack.c.h.b16 %v414
        %v614 = vunpack.c.l.b16 %v415
        %v615 = vunpack.c.h.b16 %v415
        %v616 = vunpack.c.l.b16 %v416
        %v617 = vunpack.c.h.b16 %v416
        %v618 = vunpack.c.l.b16 %v417
        %v619 = vunpack.c.h.b16 %v417
        %v620 = vunpack.c.l.b16 %v418
        %v621 = vunpack.c.h.b16 %v418
        %v622 = vunpack.c.l.b16 %v419
        %v623 = vunpack.c.h.b16 %v419
        %v624 = vunpack.c.l.b16 %v420
        %v625 = vunpack.c.h.b16 %v420
        %v626 = vunpack.c.l.b16 %v421
        %v627 = vunpack.c.h.b16 %v421
        %v628 = vunpack.c.l.b16 %v422
        %v629 = vunpack.c.h.b16 %v422
        %v630 = vunpack.c.l.b16 %v423
        %v631 = vunpack.c.h.b16 %v423
        %v632 = vunpack.c.l.b16 %v424
        %v633 = vunpack.c.h.b16 %v424
        %v634 = vunpack.c.l.b16 %v425
        %v635 = vunpack.c.h.b16 %v425
        %v636 = vunpack.c.l.b16 %v426
        %v637 = vunpack.c.h.b16 %v426
        %v638 = vunpack.c.l.b16 %v427
        %v639 = vunpack.c.h.b16 %v427
        %v640 = vunpack.c.l.b16 %v428
        %v641 = vunpack.c.h.b16 %v428
        %v642 = vunpack.c.l.b16 %v429
        %v643 = vunpack.c.h.b16 %v429
        %v644 = vpack.c.b16 %v520, %v516
        %v645 = vpack.c.b16 %v521, %v517
        %v646 = vpack.c.b16 %v522, %v518
        %v647 = vpack.c.b16 %v523, %v519
        %v648 = vpack.c.b16 %v528, %v524
        %v649 = vpack.c.b16 %v529, %v525
        %v650 = vpack.c.b16 %v530, %v526
        %v651 = vpack.c.b16 %v531, %v527
        %v652 = vpack.c.b16 %v536, %v532
        %v653 = vpack.c.b16 %v537, %v533
        %v654 = vpack.c.b16 %v538, %v534
        %v655 = vpack.c.b16 %v539, %v535
        %v656 = vpack.c.b16 %v544, %v540
        %v657 = vpack.c.b16 %v545, %v541
        %v658 = vpack.c.b16 %v546, %v542
        %v659 = vpack.c.b16 %v547, %v543
        %v660 = vpack.c.b16 %v552, %v548
        %v661 = vpack.c.b16 %v553, %v549
        %v662 = vpack.c.b16 %v554, %v550
        %v663 = vpack.c.b16 %v555, %v551
        %v664 = vpack.c.b16 %v560, %v556
        %v665 = vpack.c.b16 %v561, %v557
        %v666 = vpack.c.b16 %v562, %v558
        %v667 = vpack.c.b16 %v563, %v559
        %v668 = vpack.c.b16 %v568, %v564
        %v669 = vpack.c.b16 %v569, %v565
        %v670 = vpack.c.b16 %v570, %v566
        %v671 = vpack.c.b16 %v571, %v567
        %v672 = vpack.c.b16 %v576, %v572
        %v673 = vpack.c.b16 %v577, %v573
        %v674 = vpack.c.b16 %v578, %v574
        %v675 = vpack.c.b16 %v579, %v575
        %v676 = vpack.c.b16 %v584, %v580
        %v677 = vpack.c.b16 %v585, %v581
        %v678 = vpack.c.b16 %v586, %v582
        %v679 = vpack.c.b16 %v587, %v583
        %v680 = vpack.c.b16 %v592, %v588
        %v681 = vpack.c.b16 %v593, %v589
        %v682 = vpack.c.b16 %v594, %v590
        %v683 = vpack.c.b16 %v595, %v591
        %v684 = vpack.c.b16 %v600, %v596
        %v685 = vpack.c.b16 %v601, %v597
        %v686 = vpack.c.b16 %v602, %v598
        %v687 = vpack.c.b16 %v603, %v599
        %v688 = vpack.c.b16 %v608, %v604
        %v689 = vpack.c.b16 %v609, %v605
        %v690 = vpack.c.b16 %v610, %v606
        %v691 = vpack.c.b16 %v611, %v607
        %v692 = vpack.c.b16 %v616, %v612
        %v693 = vpack.c.b16 %v617, %v613
        %v694 = vpack.c.b16 %v618, %v614
        %v695 = vpack.c.b16 %v619, %v615
        %v696 = vpack.c.b16 %v624, %v620
        %v697 = vpack.c.b16 %v625, %v621
        %v698 = vpack.c.b16 %v626, %v622
        %v699 = vpack.c.b16 %v627, %v623
        %v700 = vpack.c.b16 %v632, %v628
        %v701 = vpack.c.b16 %v633, %v629
        %v702 = vpack.c.b16 %v634, %v630
        %v703 = vpack.c.b16 %v635, %v631
        %v704 = vpack.c.b16 %v640, %v636
        %v705 = vpack.c.b16 %v641, %v637
        %v706 = vpack.c.b16 %v642, %v638
        %v707 = vpack.c.b16 %v643, %v639
        %772 = vmatprep.subr.bf16.mxu0 %v645
        %773 = vmatpush1.bf16.msra.mxu0 %v644
        %774 = vmatprep.subr.bf16.mxu0 %v649
        %775 = vmatpush1.bf16.msra.mxu0 %v648
        %776 = vmatprep.subr.bf16.mxu0 %v653
        %777 = vmatpush1.bf16.msra.mxu0 %v652
        %778 = vmatprep.subr.bf16.mxu0 %v657
        %779 = vmatpush1.bf16.msra.mxu0 %v656
        %780 = vmatprep.subr.bf16.mxu0 %v661
        %781 = vmatpush1.bf16.msra.mxu0 %v660
        %782 = vmatprep.subr.bf16.mxu0 %v665
        %783 = vmatpush1.bf16.msra.mxu0 %v664
        %784 = vmatprep.subr.bf16.mxu0 %v669
        %785 = vmatpush1.bf16.msra.mxu0 %v668
        %786 = vmatprep.subr.bf16.mxu0 %v673
        %787 = vmatpush1.bf16.msra.mxu0 %v672
        %788 = vmatprep.subr.bf16.mxu0 %v677
        %789 = vmatpush1.bf16.msra.mxu0 %v676
        %790 = vmatprep.subr.bf16.mxu0 %v681
        %791 = vmatpush1.bf16.msra.mxu0 %v680
        %792 = vmatprep.subr.bf16.mxu0 %v685
        %793 = vmatpush1.bf16.msra.mxu0 %v684
        %794 = vmatprep.subr.bf16.mxu0 %v689
        %795 = vmatpush1.bf16.msra.mxu0 %v688
        %796 = vmatprep.subr.bf16.mxu0 %v693
        %797 = vmatpush1.bf16.msra.mxu0 %v692
        %798 = vmatprep.subr.bf16.mxu0 %v697
        %799 = vmatpush1.bf16.msra.mxu0 %v696
        %800 = vmatprep.subr.bf16.mxu0 %v701
        %801 = vmatpush1.bf16.msra.mxu0 %v700
        %802 = vmatprep.subr.bf16.mxu0 %v705
        %803 = vmatpush1.bf16.msra.mxu0 %v704
        %804 = vmatprep.mubr.bf16.mxu0 %v365
        %805 = vmatmul.mubr.bf16.gmra.mrb[0].mxu0 %v364
        %v806 = vpop.f32.mrb[0].mxu0
        %v807 = vadd.f32 %v435, %v806
        %v808 = vpop.f32.mrb[0].mxu0
        %v809 = vadd.f32 %v439, %v808
        %v810 = vpop.f32.mrb[0].mxu0
        %v811 = vadd.f32 %v435, %v810
        %v812 = vpop.f32.mrb[0].mxu0
        %v813 = vadd.f32 %v439, %v812
        %814 = vdwg.mxu0
        %815 = vmatprep.subr.bf16.mxu0 %v647
        %816 = vmatpush1.bf16.msra.mxu0 %v646
        %817 = vmatprep.subr.bf16.mxu0 %v651
        %818 = vmatpush1.bf16.msra.mxu0 %v650
        %819 = vmatprep.subr.bf16.mxu0 %v655
        %820 = vmatpush1.bf16.msra.mxu0 %v654
        %821 = vmatprep.subr.bf16.mxu0 %v659
        %822 = vmatpush1.bf16.msra.mxu0 %v658
        %823 = vmatprep.subr.bf16.mxu0 %v663
        %824 = vmatpush1.bf16.msra.mxu0 %v662
        %825 = vmatprep.subr.bf16.mxu0 %v667
        %826 = vmatpush1.bf16.msra.mxu0 %v666
        %827 = vmatprep.subr.bf16.mxu0 %v671
        %828 = vmatpush1.bf16.msra.mxu0 %v670
        %829 = vmatprep.subr.bf16.mxu0 %v675
        %830 = vmatpush1.bf16.msra.mxu0 %v674
        %831 = vmatprep.subr.bf16.mxu0 %v679
        %832 = vmatpush1.bf16.msra.mxu0 %v678
        %833 = vmatprep.subr.bf16.mxu0 %v683
        %834 = vmatpush1.bf16.msra.mxu0 %v682
        %835 = vmatprep.subr.bf16.mxu0 %v687
        %836 = vmatpush1.bf16.msra.mxu0 %v686
        %837 = vmatprep.subr.bf16.mxu0 %v691
        %838 = vmatpush1.bf16.msra.mxu0 %v690
        %839 = vmatprep.subr.bf16.mxu0 %v695
        %840 = vmatpush1.bf16.msra.mxu0 %v694
        %841 = vmatprep.subr.bf16.mxu0 %v699
        %842 = vmatpush1.bf16.msra.mxu0 %v698
        %843 = vmatprep.subr.bf16.mxu0 %v703
        %844 = vmatpush1.bf16.msra.mxu0 %v702
        %845 = vmatprep.subr.bf16.mxu0 %v707
        %846 = vmatpush1.bf16.msra.mxu0 %v706
        %847 = vmatprep.mubr.bf16.mxu0 %v365
        %848 = vmatmul.mubr.bf16.gmra.mrb[0].mxu0 %v364
        %v849 = vpop.f32.mrb[0].mxu0
        %v850 = vadd.f32 %v443, %v849
        %v851 = vpop.f32.mrb[0].mxu0
        %v852 = vadd.f32 %v447, %v851
        %v853 = vpop.f32.mrb[0].mxu0
        %v854 = vadd.f32 %v443, %v853
        %v855 = vpop.f32.mrb[0].mxu0
        %v856 = vadd.f32 %v447, %v855
        %857 = vdwg.mxu0
        %v858 = vxor.u32 %v807, 2147483648
        %v859 = vxor.u32 %v811, 2147483648
        %v860 = vmul.f32 %v858, 1.442695
        %v861 = vpow.pop %v860
        %v862 = vmul.f32 %v859, 1.442695
        %v863 = vpow.pop %v862
        %v864 = vadd.f32 %v861, 1.0
        %v865 = vadd.f32 %v863, 1.0
        %v866 = vrcp.pop %v864
        %v867 = vmul.f32 1.0, %v866
        %v868 = vrcp.pop %v865
        %v869 = vmul.f32 1.0, %v868
        %v870 = vxor.u32 %v809, 2147483648
        %v871 = vxor.u32 %v813, 2147483648
        %v872 = vmul.f32 %v870, 1.442695
        %v873 = vpow.pop %v872
        %v874 = vmul.f32 %v871, 1.442695
        %v875 = vpow.pop %v874
        %v876 = vadd.f32 %v873, 1.0
        %v877 = vadd.f32 %v875, 1.0
        %v878 = vrcp.pop %v876
        %v879 = vmul.f32 1.0, %v878
        %v880 = vrcp.pop %v877
        %v881 = vmul.f32 1.0, %v880
        %v882 = vtanh.pop %v850
        %v883 = vtanh.pop %v854
        %v884 = vxor.u32 %v852, 2147483648
        %v885 = vxor.u32 %v856, 2147483648
        %v886 = vmul.f32 %v884, 1.442695
        %v887 = vpow.pop %v886
        %v888 = vmul.f32 %v885, 1.442695
        %v889 = vpow.pop %v888
        %v890 = vadd.f32 %v887, 1.0
        %v891 = vadd.f32 %v889, 1.0
        %v892 = vrcp.pop %v890
        %v893 = vmul.f32 1.0, %v892
        %v894 = vrcp.pop %v891
        %v895 = vmul.f32 1.0, %v894
        %v896 = vld [vmem:[%s327] sm:$0xff]
        %v897 = vld [vmem:[%s327 + $0x8] sm:$0xff]
        %v898 = vmul.f32 %v879, %v896
        %v899 = vmul.f32 %v881, %v897
        %v900 = vmul.f32 %v867, %v882
        %v901 = vmul.f32 %v869, %v883
        %v902 = vadd.f32 %v898, %v900
        %v903 = vadd.f32 %v899, %v901
        %v904 = vtanh.pop %v902
        %v905 = vtanh.pop %v903
        %v906 = vmul.f32 %v893, %v904
        %v907 = vmul.f32 %v895, %v905
        %908 = vst [vmem:[%s341] sm:$0xff] %v902
        %909 = vst [vmem:[%s341 + $0x8] sm:$0xff] %v903
        %v910 = vpack.c.bf16 %v907, %v906
        %v912 = vunpack.c.l.b16 %v910
        %v913 = vunpack.c.h.b16 %v910
        %v914 = vpack.c.b16 %v912, %v912
        %v915 = vpack.c.b16 %v913, %v913
        %918 = vst [vmem:[%s336] sm:$0xf] %v914
        %919 = vst [vmem:[%s336 + $0x4] sm:$0xf] %v915
        %920 = vst [vmem:[#allocation2] sm:$0xff] %v910
        %p921 = scmp.lt.s32.totalorder %s21, 1
        %s922 = scalar_select %p921, %s21, 1
        %s923 = smul.addr %s922, 2
        %s924 = smul.addr %s923, 4
        %s925 = scalar_lea.vmem %s5, %s924
        %p926 = scmp.lt.s32.totalorder %s21, 1
        %s927 = scalar_select %p926, %s21, 1
        %s928 = smul.addr %s927, 2
        %s929 = smul.addr %s928, 8
        %s930 = scalar_lea.vmem %s6, %s929
        // Predicated region
        $region49: #{_multilayer_lstm_forward.1} parent=39 // pred_check
          %p931 = pneg %p164
        $region50: #{_multilayer_lstm_forward.1} parent=39 // pred_check_branch
          %933 = sbr.rel (%p931) target = $region52
        $region51: #{_multilayer_lstm_forward.1} parent=39 // pred_region
          _
        $region52: #{_multilayer_lstm_forward.1} parent=39 // pred_fallthru
          _
        // Predicated region
        $region53: #{_multilayer_lstm_forward.1} parent=39 // pred_check
          %p934 = pneg %p190
        $region54: #{_multilayer_lstm_forward.1} parent=39 // pred_check_branch
          %936 = sbr.rel (%p934) target = $region56
        $region55: #{_multilayer_lstm_forward.1} parent=39 // pred_region
          _
        $region56: #{_multilayer_lstm_forward.1} parent=39 // pred_fallthru
          _
      $region40: #{_multilayer_lstm_forward.1} parent=5 // pred_fallthru
        _
      %p937 = scmp.le.s32.totalorder 2, %s16
      // Predicated region
      $region57: #{_multilayer_lstm_forward.1} parent=5 // pred_check
        %p938 = pneg %p937
      $region58: #{_multilayer_lstm_forward.1} parent=5 // pred_check_branch
        %940 = sbr.rel (%p938) target = $region60
      $region59: #{_multilayer_lstm_forward.1} parent=5 // pred_region
        %s941 = ssub.s32 %s16, 2
        // Predicated region
        $region61: #{_multilayer_lstm_forward.1} parent=59 // pred_check
          %p942 = pneg %p170
        $region62: #{_multilayer_lstm_forward.1} parent=59 // pred_check_branch
          %944 = sbr.rel (%p942) target = $region64
        $region63: #{_multilayer_lstm_forward.1} parent=59 // pred_region
          %p945 = scmp.lt.s32.totalorder %s22, 1
          %s946 = scalar_select %p945, %s22, 1
          %s947 = smul.addr %s946, 2
          %s948 = smul.addr %s947, 4
          %s949 = scalar_lea.vmem %s5, %s948
        $region64: #{_multilayer_lstm_forward.1} parent=59 // pred_fallthru
          _
        // Predicated region
        $region65: #{_multilayer_lstm_forward.1} parent=59 // pred_check
          %p950 = pneg %p196
        $region66: #{_multilayer_lstm_forward.1} parent=59 // pred_check_branch
          %952 = sbr.rel (%p950) target = $region68
        $region67: #{_multilayer_lstm_forward.1} parent=59 // pred_region
          %p953 = scmp.lt.s32.totalorder %s22, 1
          %s954 = scalar_select %p953, %s22, 1
          %s955 = smul.addr %s954, 2
          %s956 = smul.addr %s955, 8
          %s957 = scalar_lea.vmem %s6, %s956
        $region68: #{_multilayer_lstm_forward.1} parent=59 // pred_fallthru
          _
      $region60: #{_multilayer_lstm_forward.1} parent=5 // pred_fallthru
        _
    $region6: #{_multilayer_lstm_forward.1} parent=1 // loop_footer
      %s20 = sadd.s32 1, %s16
    $region7: #{_multilayer_lstm_forward.1} parent=1 // loop_footer_branch
      %15 = sbr.rel target = $region3
    $region8: #{_multilayer_lstm_forward.1} parent=1 // loop_exit
      _
    %958 = vsyncpa [#allocation4], 1
    %s959 = scalar_lea.sflag [#allocation4], 1
    %960 = vsyncpa %s959, 1

</llo_original>
